<compile_context>
chip_gen: v7x
topology: tpu7x:2x2x1
jax: 0.10.0
libtpu: 0.0.40
codegen_flags: <defaults>
</compile_context>

<pallas_src>
import math

import jax
import jax.numpy as jnp
from jax.experimental import pallas as pl
from jax.experimental.pallas import tpu as pltpu


def _affine_kernel(x_ref, s_ref, b_ref, o_ref):
    # x_ref/o_ref: (row_tile, lane_tile) block for this grid step.
    # s_ref/b_ref: (row_tile, 1) float32 per-row params for this row block.
    x = x_ref[...].astype(jnp.float32)
    o_ref[...] = (x * s_ref[...] + b_ref[...]).astype(o_ref.dtype)


def _choose_tiles(nc, hw, itemsize, target_block_bytes=4 * 1024 * 1024):
    """Pick (row_tile, lane_tile): ~target-sized blocks, layout-legal shapes."""
    # Sublane packing factor: 8 rows for 32-bit, 16 for 16-bit, 32 for 8-bit.
    sub = max(8, 32 // itemsize)
    nc_pad = -(-nc // sub) * sub

    # Lane tile: full extent when a minimal (sub-row) slab fits the budget,
    # otherwise a multiple of 128 (keeps blocks bounded for huge spatial dims).
    if hw <= 128 or sub * hw * itemsize <= target_block_bytes:
        lane_tile = hw
    else:
        lane_tile = (target_block_bytes // (sub * itemsize)) // 128 * 128
        lane_tile = max(128, min(lane_tile, (hw // 128) * 128))

    # Row tile: fill the block budget, multiple of `sub`, bounded by padded rows.
    rows = (target_block_bytes // max(1, lane_tile * itemsize)) // sub * sub
    rows = max(sub, min(rows, nc_pad))

    # Guarantee at least 2 row blocks when possible so both v7x TCs get work.
    if rows >= nc_pad and nc_pad > sub:
        rows = -(-(nc_pad // 2) // sub) * sub

    return rows, lane_tile


def affine_forward(x, scale=None, bias=None):
    """x: (N, C, *spatial); scale, bias: (C,) or None. Returns x*scale + bias."""
    orig_shape = x.shape
    N, C = orig_shape[0], orig_shape[1]
    HW = math.prod(orig_shape[2:]) if len(orig_shape) > 2 else 1
    NC = N * C

    if scale is None:
        scale = jnp.ones((C,), dtype=jnp.float32)
    if bias is None:
        bias = jnp.zeros((C,), dtype=jnp.float32)

    x2d = x.reshape(NC, HW)

    # Per-row params, kept in float32 (matches the f32 nn.Parameters; compute
    # happens in f32 and only the store casts to the input dtype).
    scale_rows = jnp.tile(scale.astype(jnp.float32), N).reshape(NC, 1)
    bias_rows = jnp.tile(bias.astype(jnp.float32), N).reshape(NC, 1)

    itemsize = jnp.dtype(x.dtype).itemsize
    row_tile, lane_tile = _choose_tiles(NC, HW, itemsize)
    grid = (pl.cdiv(NC, row_tile), pl.cdiv(HW, lane_tile))

    cost = pl.CostEstimate(
        flops=2 * NC * HW,
        transcendentals=0,
        bytes_accessed=2 * NC * HW * itemsize + 2 * NC * 4,
    )

    out2d = pl.pallas_call(
        _affine_kernel,
        out_shape=jax.ShapeDtypeStruct((NC, HW), x.dtype),
        grid_spec=pltpu.PrefetchScalarGridSpec(
            num_scalar_prefetch=0,
            grid=grid,
            in_specs=[
                pl.BlockSpec((row_tile, lane_tile), lambda i, j: (i, j)),
                pl.BlockSpec((row_tile, 1), lambda i, j: (i, 0)),  # per-block params
                pl.BlockSpec((row_tile, 1), lambda i, j: (i, 0)),  # per-block params
            ],
            out_specs=pl.BlockSpec((row_tile, lane_tile), lambda i, j: (i, j)),
        ),
        compiler_params=pltpu.CompilerParams(
            dimension_semantics=("parallel", "parallel"),
            vmem_limit_bytes=48 * 1024 * 1024,  # safe on v7x (64 MiB/TC) and v5e/v6e
        ),
        cost_estimate=cost,
    )(x2d, scale_rows, bias_rows)

    return out2d.reshape(orig_shape)


if __name__ == "__main__":
    key = jax.random.PRNGKey(0)
    k1, k2, k3 = jax.random.split(key, 3)

    # Main case: matches Affine(num_parameters=C) applied to an NCHW tensor.
    N, C, H, W = 2, 4, 16, 16
    scale_init = 1.0
    x = jax.random.normal(k1, (N, C, H, W), dtype=jnp.float32)
    scale = jnp.ones((C,), dtype=jnp.float32) * scale_init + 0.1 * jax.random.normal(
        k2, (C,), dtype=jnp.float32
    )
    bias = jnp.zeros((C,), dtype=jnp.float32) + 0.1 * jax.random.normal(
        k3, (C,), dtype=jnp.float32
    )

    out = jax.block_until_ready(affine_forward(x, scale, bias))
    ref = x * scale[None, :, None, None] + bias[None, :, None, None]
    assert out.shape == (N, C, H, W)
    assert jnp.allclose(out, ref, atol=1e-6, rtol=1e-6)

    # Ragged case: non-multiple-of-8 rows and non-multiple-of-128 lanes
    # (exercises partial row/lane blocks and masked stores — no wrapper padding).
    N2, C2, H2, W2 = 3, 5, 7, 7
    x2 = jax.random.normal(k1, (N2, C2, H2, W2), dtype=jnp.float32)
    s2 = jnp.ones((C2,), dtype=jnp.float32) + 0.1 * jax.random.normal(
        k2, (C2,), dtype=jnp.float32
    )
    b2 = 0.1 * jax.random.normal(k3, (C2,), dtype=jnp.float32)
    out2 = jax.block_until_ready(affine_forward(x2, s2, b2))
    ref2 = x2 * s2[None, :, None, None] + b2[None, :, None, None]
    assert jnp.allclose(out2, ref2, atol=1e-6, rtol=1e-6)

    # bf16 input path: params stay f32, FMA in f32, cast only on the store.
    xb = x2.astype(jnp.bfloat16)
    outb = jax.block_until_ready(affine_forward(xb, s2, b2))
    refb = (
        xb.astype(jnp.float32) * s2[None, :, None, None] + b2[None, :, None, None]
    ).astype(jnp.bfloat16)
    assert outb.dtype == jnp.bfloat16
    assert jnp.allclose(
        outb.astype(jnp.float32), refb.astype(jnp.float32), atol=2e-2, rtol=2e-2
    )

    print("KERNEL_OK")
</pallas_src>

<mosaic_0001>
module attributes {stable_mosaic.version = 11 : i64} {
  func.func @_affine_kernel(%arg0: i32, %arg1: i32, %arg2: memref<8x256xf32, #tpu.memory_space<vmem>>, %arg3: memref<8x1xf32, #tpu.memory_space<vmem>>, %arg4: memref<8x1xf32, #tpu.memory_space<vmem>>, %arg5: memref<8x256xf32, #tpu.memory_space<vmem>>) attributes {dimension_semantics = [#tpu.dimension_semantics<parallel>, #tpu.dimension_semantics<parallel>], iteration_bounds = array<i64: 1, 1>, scalar_prefetch = 0 : i64, scratch_operands = 0 : i64, tpu.core_type = #tpu.core_type<tc>, window_params = [{transform_indices = @transform_0, window_bounds = array<i64: 8, 256>}, {transform_indices = @transform_1, window_bounds = array<i64: 8, 1>}, {transform_indices = @transform_2, window_bounds = array<i64: 8, 1>}, {transform_indices = @transform_3, window_bounds = array<i64: 8, 256>}]} {
    %c0 = arith.constant 0 : index
    %c0_0 = arith.constant 0 : index
    %0 = vector.load %arg2[%c0, %c0_0] : memref<8x256xf32, #tpu.memory_space<vmem>>, vector<8x256xf32>
    %c0_1 = arith.constant 0 : index
    %c0_2 = arith.constant 0 : index
    %1 = vector.load %arg3[%c0_1, %c0_2] : memref<8x1xf32, #tpu.memory_space<vmem>>, vector<8x1xf32>
    %2 = vector.broadcast %1 : vector<8x1xf32> to vector<8x256xf32>
    %3 = arith.mulf %0, %2 : vector<8x256xf32>
    %c0_3 = arith.constant 0 : index
    %c0_4 = arith.constant 0 : index
    %4 = vector.load %arg4[%c0_3, %c0_4] : memref<8x1xf32, #tpu.memory_space<vmem>>, vector<8x1xf32>
    %5 = vector.broadcast %4 : vector<8x1xf32> to vector<8x256xf32>
    %6 = arith.addf %3, %5 : vector<8x256xf32>
    %c0_5 = arith.constant 0 : index
    %c0_6 = arith.constant 0 : index
    %7 = vector.load %arg5[%c0_5, %c0_6] : memref<8x256xf32, #tpu.memory_space<vmem>>, vector<8x256xf32>
    tpu.vector_store %arg5[%c0_5, %c0_6], %6 {strides = array<i32>} : memref<8x256xf32, #tpu.memory_space<vmem>>, vector<8x256xf32>,
    return
  }
  func.func @transform_0(%arg0: i32, %arg1: i32) -> (i32, i32) {
    %c0_i32 = arith.constant 0 : i32
    return %arg0, %arg1 : i32, i32
  }
  func.func @transform_1(%arg0: i32, %arg1: i32) -> (i32, i32) {
    %c0_i32 = arith.constant 0 : i32
    %c0_i32_0 = arith.constant 0 : i32
    return %arg0, %c0_i32 : i32, i32
  }
  func.func @transform_2(%arg0: i32, %arg1: i32) -> (i32, i32) {
    %c0_i32 = arith.constant 0 : i32
    %c0_i32_0 = arith.constant 0 : i32
    return %arg0, %c0_i32 : i32, i32
  }
  func.func @transform_3(%arg0: i32, %arg1: i32) -> (i32, i32) {
    %c0_i32 = arith.constant 0 : i32
    return %arg0, %arg1 : i32, i32
  }
}

</mosaic_0001>

<llo_original>
// kernel: tpu_custom_call.1
$region0: #{tpu_custom_call.1}
  #allocation0 [shape = 'u32[]', space=smem, size = 0x4, offset = 0x4, fixed_abs, tag = 'smem constant byte address 0x4 - core index']
  #allocation1 [shape = 'u32[144,128]{1,0:T(1,128)}', space=vmem, size = 0x12000, scoped, tag = 'internal scratch']
  %s0 = inlined_call_operand.vmem [shape: f32[8,256], index: 0, kind: input, shape index: {}]
  %s1 = inlined_call_operand.vmem [shape: f32[8,1], index: 1, kind: input, shape index: {}]
  %s2 = inlined_call_operand.vmem [shape: f32[8,1], index: 2, kind: input, shape index: {}]
  %s3 = inlined_call_operand.hbm [shape: f32[8,256], index: 3, kind: output, shape index: {}]
  %s4 = sld [smem:[#allocation0]]
  $region22: #{tpu_custom_call.1} parent=0
    _
  %s6 = ssub.s32 1, %s4
  %s7 = scalar_select 0, %s6, %s4
  $region1: #{tpu_custom_call.1} parent=0
    #allocation2 [shape = 'u8[8192]{0}', space=vmem, size = 0x2000, scoped, tag = 'output window, operand 0, single buffered']
    #allocation3 [shape = 's32[1]{0}', space=sflag, size = 0x4, scoped, tag = 'scoped memory for tpu_custom_call.1']
    %8 = vsyncpa [#allocation3], 0
    // Predicated region
    $region2: #{tpu_custom_call.1} parent=1 // pred_check
      _
    $region3: #{tpu_custom_call.1} parent=1 // pred_check_branch
      %10 = sbr.rel (0) target = $region5
    $region4: #{tpu_custom_call.1} parent=1 // pred_region
      _
    $region5: #{tpu_custom_call.1} parent=1 // pred_fallthru
      _
    // Predicated region
    $region6: #{tpu_custom_call.1} parent=1 // pred_check
      _
    $region7: #{tpu_custom_call.1} parent=1 // pred_check_branch
      %12 = sbr.rel (0) target = $region9
    $region8: #{tpu_custom_call.1} parent=1 // pred_region
      _
    $region9: #{tpu_custom_call.1} parent=1 // pred_fallthru
      _
    // Predicated region
    $region10: #{tpu_custom_call.1} parent=1 // pred_check
      _
    $region11: #{tpu_custom_call.1} parent=1 // pred_check_branch
      %14 = sbr.rel (0) target = $region13
    $region12: #{tpu_custom_call.1} parent=1 // pred_region
      _
    $region13: #{tpu_custom_call.1} parent=1 // pred_fallthru
      _
    %v15 = vld [vmem:[%s0] sm:$0xff]
    %v16 = vld [vmem:[%s0 + $0x8] sm:$0xff]
    %v17 = vld [vmem:[%s1] sm:$0xff]
    %19 = vset.pattern.permute.xlu0 0
    %20 = vperm.xlu0 %19, %v17
    %v21 = vpop.permute.xlu0 %20
    %v23 = vmul.f32 %v15, %v21
    %v24 = vmul.f32 %v16, %v21
    %v25 = vld [vmem:[%s2] sm:$0xff]
    %27 = vset.pattern.permute.xlu0 0
    %28 = vperm.xlu0 %27, %v25
    %v29 = vpop.permute.xlu0 %28
    %v31 = vadd.f32 %v23, %v29
    %v32 = vadd.f32 %v24, %v29
    %33 = vst [vmem:[#allocation2] sm:$0xff] %v31
    %34 = vst [vmem:[#allocation2 + $0x8] sm:$0xff] %v32
    // Predicated region
    $region14: #{tpu_custom_call.1} parent=1 // pred_check
      _
    $region15: #{tpu_custom_call.1} parent=1 // pred_check_branch
      %36 = sbr.rel (0) target = $region17
    $region16: #{tpu_custom_call.1} parent=1 // pred_region
      %s38 = ssub.s32 256, 256
      %39 = vsyncadd [#allocation3], %s38
      %s41 = sshll.u32 [#allocation2], 4
      %s42 = int_to_ptr.vmem [resolvable:$true] %s41
      %44 = dma.vmem_to_hbm [thread:$0]  %s42, 256, %s3, [#allocation3]
    $region17: #{tpu_custom_call.1} parent=1 // pred_fallthru
      _
    // Predicated region
    $region18: #{tpu_custom_call.1} parent=1 // pred_check
      _
    $region19: #{tpu_custom_call.1} parent=1 // pred_check_branch
      %46 = sbr.rel (0) target = $region21
    $region20: #{tpu_custom_call.1} parent=1 // pred_region
      %47 = dma.done [#allocation3], 256
    $region21: #{tpu_custom_call.1} parent=1 // pred_fallthru
      _
    %48 = vsyncpa [#allocation3], 1

</llo_original>
